<compile_context>
chip_gen: v5e
topology: v5e:2x2
jax: 0.10.0
libtpu: 0.0.40
codegen_flags: <defaults>
</compile_context>

<pallas_src>
import functools

import jax
import jax.numpy as jnp
from jax.experimental import pallas as pl
from jax.experimental.pallas import tpu as pltpu


# ----------------------------- per-generation VMEM budget -----------------------------

def _vmem_limit_bytes():
    # v7x only has 64 MiB of VMEM per TensorCore; budget ~3/4 of whatever this chip has.
    try:
        cap_mib = int(pltpu.get_tpu_info().vmem_capacity_bytes) // (1024 * 1024)
        return max(32, min(96, cap_mib * 3 // 4)) * 1024 * 1024
    except Exception:
        return 48 * 1024 * 1024


_VMEM_LIMIT = _vmem_limit_bytes()


def _cparams(dims=None):
    return pltpu.CompilerParams(dimension_semantics=dims, vmem_limit_bytes=_VMEM_LIMIT)


def _round_up(x, m):
    return ((x + m - 1) // m) * m


def _tile(dim, cap, align):
    """Largest tile <= cap that divides dim and is a multiple of align (falls back to full dim)."""
    if dim <= cap:
        return dim
    t = (cap // align) * align
    while t >= align:
        if dim % t == 0:
            return t
        t -= align
    return dim


def _divisor(dim, cap):
    t = max(1, min(dim, cap))
    while dim % t:
        t -= 1
    return t


# ----------------------------- Pallas kernels -----------------------------

def _matmul_bn_kernel(a_ref, b_ref, shift_ref, o_ref, acc_ref, *, relu):
    # Tiled (tm,tk)@(tk,tn) on the MXU; K is the innermost ("arbitrary") grid axis.
    @pl.when(pl.program_id(2) == 0)
    def _():
        acc_ref[...] = jnp.zeros_like(acc_ref)

    acc_ref[...] += jnp.dot(a_ref[...], b_ref[...], preferred_element_type=jnp.float32)

    @pl.when(pl.program_id(2) == pl.num_programs(2) - 1)
    def _():
        y = acc_ref[...] + shift_ref[...]
        if relu:
            y = jnp.maximum(y, 0.0)
        o_ref[...] = y.astype(o_ref.dtype)


def _conv3x3_kernel(xpf_ref, w_ref, shift_ref, o_ref, acc_ref, *, th, wp, relu):
    # Shifted-slab implicit im2col, 3x3 stride-1.
    #   xpf_ref : (Hp*Wp, Cin) flattened padded image (pad: top 1, bottom 2, left 1, right 1)
    #   w_ref   : (3, 3, Cin, Cout) fully resident weights
    #   o_ref   : (th, Wo, Cout) output row-block
    #   acc_ref : ((th-1)*Wp + Wo, Cout) f32 accumulator
    # For tap (di, dj) the contiguous slab starting at (r0+di)*Wp + dj contributes, at accumulator
    # index rr*Wp + c, exactly the padded pixel (r0+rr+di, c+dj) -> one big matmul per tap; the two
    # junk columns per row (c in {Wo, Wo+1}) are never extracted.
    wo = o_ref.shape[1]
    L = acc_ref.shape[0]
    r0 = pl.program_id(1) * th

    acc_ref[...] = jnp.zeros_like(acc_ref)
    for di in range(3):
        for dj in range(3):
            start = (r0 + di) * wp + dj
            acc_ref[...] += jnp.dot(xpf_ref[pl.ds(start, L), :], w_ref[di, dj],
                                    preferred_element_type=jnp.float32)

    shift = shift_ref[...]
    for rr in range(th):
        y = acc_ref[pl.ds(rr * wp, wo), :] + shift
        if relu:
            y = jnp.maximum(y, 0.0)
        o_ref[rr] = y.astype(o_ref.dtype)


def _se_gate_kernel(x_ref, w1_ref, w2_ref, g_ref, acc_ref, *, inv_hw):
    # Squeeze (spatial sum accumulated over the inner grid axis, one accumulator per batch sample)
    # then FC -> ReLU -> FC -> sigmoid on the last step.
    k = pl.program_id(1)

    @pl.when(k == 0)
    def _():
        acc_ref[...] = jnp.zeros_like(acc_ref)

    acc_ref[...] += jnp.sum(x_ref[...].astype(jnp.float32), axis=0, keepdims=True)

    @pl.when(k == pl.num_programs(1) - 1)
    def _():
        s = (acc_ref[...] * inv_hw).astype(jnp.bfloat16)                       # (1, C)
        h = jnp.maximum(jnp.dot(s, w1_ref[...], preferred_element_type=jnp.float32), 0.0)
        z = jnp.dot(h.astype(jnp.bfloat16), w2_ref[...], preferred_element_type=jnp.float32)
        g_ref[...] = 1.0 / (1.0 + jnp.exp(-z))                                 # sigmoid gate


def _excite_add_relu_kernel(x_ref, r_ref, g_ref, o_ref):
    # relu(conv3_out * gate + identity) in one pass over the wide activation.
    y = x_ref[...].astype(jnp.float32) * g_ref[...] + r_ref[...].astype(jnp.float32)
    o_ref[...] = jnp.maximum(y, 0.0).astype(o_ref.dtype)


def _max3_kernel(a_ref, b_ref, c_ref, o_ref):
    o_ref[...] = jnp.maximum(jnp.maximum(a_ref[...], b_ref[...]), c_ref[...])


def _head_loss_kernel(x_ref, w_ref, b_ref, pm_ref, logits_ref, loss_ref, acc_ref, *, inv_hw):
    # Global average pool (accumulated over the HW grid axis) + Linear (N padded to 128 lanes) +
    # ModelWithLoss loss:  for each sample i, positive p: -logit[p] + logsumexp({p} U negatives).
    k = pl.program_id(0)

    @pl.when(k == 0)
    def _():
        acc_ref[...] = jnp.zeros_like(acc_ref)

    acc_ref[...] += jnp.sum(x_ref[...].astype(jnp.float32), axis=1)            # (B, C)

    @pl.when(k == pl.num_programs(0) - 1)
    def _():
        pooled = (acc_ref[...] * inv_hw).astype(jnp.bfloat16)
        logits = jnp.dot(pooled, w_ref[...], preferred_element_type=jnp.float32) + b_ref[...]
        logits_ref[...] = logits                                               # f32 (B, Cp)

        # pm is 1.0 at positive classes.  logits stay f32 and padded classes carry a -1e9 bias, so
        # exp(-1e9 - m) underflows to exactly 0 and padded columns never contaminate the result.
        pm = pm_ref[...]
        m = jnp.max(logits, axis=1, keepdims=True)                             # global shift (exact)
        e = jnp.exp(logits - m)
        s_neg = jnp.sum(e * (1.0 - pm), axis=1, keepdims=True)                 # sum over negatives
        per = (m + jnp.log(e + s_neg) - logits) * pm
        total = jnp.sum(jnp.sum(per, axis=1, keepdims=True), axis=0, keepdims=True)   # (1, 1)
        denom = jnp.sum(jnp.sum(pm, axis=1, keepdims=True), axis=0, keepdims=True)    # (1, 1)
        loss_ref[...] = total / denom


# ----------------------------- Pallas-call wrappers -----------------------------

def _tiled_matmul(a, wm, shift, *, relu):
    """(M,K)@(K,N) bf16 matmul + shift(+ReLU), tiled over an (M,N,K) grid."""
    M, K = a.shape
    N = wm.shape[1]

    # Pad M to an 8/256 multiple so tm stays on the aligned fast path (review item: no awkward 56/224).
    if M >= 256:
        Mp, tm = _round_up(M, 256), 256
    else:
        Mp = _round_up(M, 8)
        tm = Mp
    if Mp != M:
        a = jnp.pad(a, ((0, Mp - M), (0, 0)))

    tn = _tile(N, 512, 256) if N % 256 == 0 else _tile(N, 512, 128)
    tk = _tile(K, 2048, 256) if K % 256 == 0 else _tile(K, 2048, 128)
    grid = (Mp // tm, N // tn, K // tk)

    out = pl.pallas_call(
        functools.partial(_matmul_bn_kernel, relu=relu),
        out_shape=jax.ShapeDtypeStruct((Mp, N), jnp.bfloat16),
        grid_spec=pltpu.PrefetchScalarGridSpec(
            num_scalar_prefetch=0,
            grid=grid,
            in_specs=[
                pl.BlockSpec((tm, tk), lambda i, j, k: (i, k)),
                pl.BlockSpec((tk, tn), lambda i, j, k: (k, j)),
                pl.BlockSpec((1, tn), lambda i, j, k: (0, j)),
            ],
            out_specs=pl.BlockSpec((tm, tn), lambda i, j, k: (i, j)),
            scratch_shapes=[pltpu.VMEM((tm, tn), jnp.float32)],
        ),
        compiler_params=_cparams(("parallel", "parallel", "arbitrary")),
    )(a, wm, shift)
    return out[:M] if Mp != M else out


def _conv3x3_s1(x, wk, shift, *, relu):
    """3x3 stride-1 conv via the shifted-slab implicit-im2col kernel (no 9x HBM materialisation)."""
    B, H, W, Cin = x.shape
    Cout = wk.shape[3]
    Wp = W + 2
    # pad: 1 top, 2 bottom, 1 left, 1 right; the extra bottom row keeps every tap slab in bounds.
    xp = jnp.pad(x, ((0, 0), (1, 2), (1, 1), (0, 0)))
    xpf = xp.reshape(B, (H + 3) * Wp, Cin)

    # Row-block size from a VMEM byte budget (f32 accumulator + lhs slab + output tile).
    per_row = Wp * max(Cin, Cout) * 8
    th = _divisor(H, max(1, min(H, (6 * 1024 * 1024) // per_row)))
    L = (th - 1) * Wp + W
    grid = (B, H // th)

    return pl.pallas_call(
        functools.partial(_conv3x3_kernel, th=th, wp=Wp, relu=relu),
        out_shape=jax.ShapeDtypeStruct((B, H, W, Cout), jnp.bfloat16),
        grid_spec=pltpu.PrefetchScalarGridSpec(
            num_scalar_prefetch=0,
            grid=grid,
            in_specs=[
                pl.BlockSpec((None, (H + 3) * Wp, Cin), lambda b, i: (b, 0, 0)),
                # full weights resident; constant index_map -> DMA'd once, not per grid step
                pl.BlockSpec((3, 3, Cin, Cout), lambda b, i: (0, 0, 0, 0)),
                pl.BlockSpec((1, Cout), lambda b, i: (0, 0)),
            ],
            out_specs=pl.BlockSpec((None, th, W, Cout), lambda b, i: (b, i, 0, 0)),
            scratch_shapes=[pltpu.VMEM((L, Cout), jnp.float32)],
        ),
        compiler_params=_cparams(("parallel", "parallel")),
    )(xpf, wk, shift)


def _im2col(x, kh, kw, stride, pad):
    # Explicit im2col (strided convs + small-spatial 3x3 convs); rows ordered (di, dj, cin).
    B, H, W, C = x.shape
    xp = jnp.pad(x, ((0, 0), (pad, pad), (pad, pad), (0, 0)))
    Ho = (H + 2 * pad - kh) // stride + 1
    Wo = (W + 2 * pad - kw) // stride + 1
    cols = []
    for di in range(kh):
        for dj in range(kw):
            cols.append(xp[:, di:di + stride * (Ho - 1) + 1:stride,
                           dj:dj + stride * (Wo - 1) + 1:stride, :])
    patches = jnp.stack(cols, axis=3)                                          # (B, Ho, Wo, kh*kw, C)
    return patches.reshape(B * Ho * Wo, kh * kw * C), Ho, Wo


def _fold_bn(p):
    scale = p["gamma"] / jnp.sqrt(p["var"] + 1e-5)
    shift = p["beta"] - p["mean"] * scale
    return scale, shift


@functools.partial(jax.jit, static_argnames=("stride", "relu"))
def conv_bn(x, p, *, stride, relu):
    """Conv2d (no bias) + inference BatchNorm (scale folded into weights) + optional ReLU.  NHWC."""
    w = p["w"]                                                                 # (Cout, Cin, kh, kw)
    Cout, Cin, kh, kw = w.shape
    B, H, W, _ = x.shape
    scale, shift = _fold_bn(p)
    shift = shift.reshape(1, Cout).astype(jnp.float32)

    if kh == 1:                                                                # 1x1 (optionally strided)
        # TODO(synk): the stride-2 read could be a strided BlockSpec instead of an XLA slice copy.
        xs = x if stride == 1 else x[:, ::stride, ::stride, :]
        _, Ho, Wo, _ = xs.shape
        a = xs.reshape(B * Ho * Wo, Cin)
        wm = (w.reshape(Cout, Cin).T * scale[None, :]).astype(jnp.bfloat16)
        y = _tiled_matmul(a, wm, shift, relu=relu)
        return y.reshape(B, Ho, Wo, Cout)

    if kh == 3 and stride == 1 and H * W > 196:                                # implicit im2col
        wk = (jnp.transpose(w, (2, 3, 1, 0)) * scale[None, None, None, :]).astype(jnp.bfloat16)
        return _conv3x3_s1(x, wk, shift, relu=relu)

    # strided kxk (stem 7x7/2, the three 3x3/2) and small-spatial 3x3: explicit im2col, full-K matmul
    a, Ho, Wo = _im2col(x, kh, kw, stride, kh // 2)
    wm = (jnp.transpose(w, (2, 3, 1, 0)).reshape(kh * kw * Cin, Cout) * scale[None, :])
    wm = wm.astype(jnp.bfloat16)
    K = a.shape[1]
    if K % 128:                                                                # pad K (e.g. stem 147 -> 256)
        Kp = _round_up(K, 128)
        a = jnp.pad(a, ((0, 0), (0, Kp - K)))
        wm = jnp.pad(wm, ((0, Kp - K), (0, 0)))
    y = _tiled_matmul(a, wm, shift, relu=relu)
    return y.reshape(B, Ho, Wo, Cout)


@jax.jit
def se_gate(x, w1, w2):
    """Fused squeeze + FC -> ReLU -> FC -> sigmoid; returns the (B, 1, C) gate."""
    B, H, W, C = x.shape
    HW = H * W
    thw = _tile(HW, max(8, (4 * 1024 * 1024) // (4 * C)), 8)
    return pl.pallas_call(
        functools.partial(_se_gate_kernel, inv_hw=1.0 / HW),
        out_shape=jax.ShapeDtypeStruct((B, 1, C), jnp.float32),
        grid_spec=pltpu.PrefetchScalarGridSpec(
            num_scalar_prefetch=0,
            grid=(B, HW // thw),                                               # batch axis is parallel
            in_specs=[
                pl.BlockSpec((None, thw, C), lambda b, k: (b, k, 0)),
                pl.BlockSpec(w1.shape, lambda b, k: (0, 0)),
                pl.BlockSpec(w2.shape, lambda b, k: (0, 0)),
            ],
            out_specs=pl.BlockSpec((None, 1, C), lambda b, k: (b, 0, 0)),
            scratch_shapes=[pltpu.VMEM((1, C), jnp.float32)],
        ),
        compiler_params=_cparams(("parallel", "arbitrary")),
    )(x.reshape(B, HW, C), w1.astype(jnp.bfloat16), w2.astype(jnp.bfloat16))


@jax.jit
def excite_add_relu(x, identity, gate):
    """relu(x * gate + identity), tiled over (batch, row) blocks sized by a VMEM byte budget."""
    B, H, W, C = x.shape
    HW = H * W
    trow = _tile(HW, max(8, (2 * 1024 * 1024) // (2 * C)), 8)
    y = pl.pallas_call(
        _excite_add_relu_kernel,
        out_shape=jax.ShapeDtypeStruct((B, HW, C), jnp.bfloat16),
        grid_spec=pltpu.PrefetchScalarGridSpec(
            num_scalar_prefetch=0,
            grid=(B, HW // trow),
            in_specs=[
                pl.BlockSpec((None, trow, C), lambda b, i: (b, i, 0)),
                pl.BlockSpec((None, trow, C), lambda b, i: (b, i, 0)),
                pl.BlockSpec((None, 1, C), lambda b, i: (b, 0, 0)),
            ],
            out_specs=pl.BlockSpec((None, trow, C), lambda b, i: (b, i, 0)),
        ),
        compiler_params=_cparams(("parallel", "parallel")),
    )(x.reshape(B, HW, C), identity.reshape(B, HW, C), gate)
    return y.reshape(B, H, W, C)


def _max3(a, b, c):
    R, C = a.shape
    tr = _tile(R, 2048, 8)
    return pl.pallas_call(
        _max3_kernel,
        out_shape=jax.ShapeDtypeStruct((R, C), a.dtype),
        grid_spec=pltpu.PrefetchScalarGridSpec(
            num_scalar_prefetch=0,
            grid=(R // tr,),
            in_specs=[pl.BlockSpec((tr, C), lambda i: (i, 0))] * 3,
            out_specs=pl.BlockSpec((tr, C), lambda i: (i, 0)),
        ),
        compiler_params=_cparams(("parallel",)),
    )(a, b, c)


@jax.jit
def max_pool_3x3_s2(x):
    """3x3/2 max pool (pad=1) as two separable passes via even/odd phase decomposition."""
    # TODO(synk): the shifted operands are built with wrapper-side slices; could be fused in-kernel.
    B, H, W, C = x.shape
    neg = -1e30
    # W direction
    Wo = (W + 2 - 3) // 2 + 1
    padw = 1 + (W % 2)
    xw = jnp.pad(x, ((0, 0), (0, 0), (1, padw), (0, 0)), constant_values=neg)
    ph = xw.reshape(B, H, (W + 1 + padw) // 2, 2, C)
    E, O = ph[:, :, :, 0, :], ph[:, :, :, 1, :]
    a, b, c = E[:, :, :Wo], O[:, :, :Wo], E[:, :, 1:Wo + 1]
    y = _max3(a.reshape(B * H * Wo, C), b.reshape(B * H * Wo, C), c.reshape(B * H * Wo, C))
    y = y.reshape(B, H, Wo, C)
    # H direction
    Ho = (H + 2 - 3) // 2 + 1
    padh = 1 + (H % 2)
    yh = jnp.pad(y, ((0, 0), (1, padh), (0, 0), (0, 0)), constant_values=neg)
    ph = yh.reshape(B, (H + 1 + padh) // 2, 2, Wo, C)
    E, O = ph[:, :, 0], ph[:, :, 1]
    a, b, c = E[:, :Ho], O[:, :Ho], E[:, 1:Ho + 1]
    z = _max3(a.reshape(B * Ho * Wo, C), b.reshape(B * Ho * Wo, C), c.reshape(B * Ho * Wo, C))
    return z.reshape(B, Ho, Wo, C)


@jax.jit
def head_loss(x, fc_w, fc_b, pos_mask):
    """Global avg pool + Linear (padded to 128 output lanes) + ModelWithLoss loss, blocked over HW."""
    B, H, W, C = x.shape
    HW = H * W
    n = fc_w.shape[1]
    Cp = _round_up(n, 128)
    w_pad = jnp.pad(fc_w, ((0, 0), (0, Cp - n))).astype(jnp.bfloat16)
    # Padded class columns get a -1e9 bias so they never act as negatives or affect the max
    # (logits are kept in f32, where exp(-1e9 - m) underflows to exactly 0).
    b_pad = jnp.pad(fc_b.reshape(1, n), ((0, 0), (0, Cp - n)), constant_values=-1e9)
    b_pad = b_pad.astype(jnp.float32)
    m_pad = jnp.pad(pos_mask, ((0, 0), (0, Cp - n))).astype(jnp.float32)

    thw = _tile(HW, max(8, (8 * 1024 * 1024) // (4 * B * C)), 8)
    logits, loss = pl.pallas_call(
        functools.partial(_head_loss_kernel, inv_hw=1.0 / HW),
        out_shape=(jax.ShapeDtypeStruct((B, Cp), jnp.float32),
                   jax.ShapeDtypeStruct((1, 1), jnp.float32)),
        grid_spec=pltpu.PrefetchScalarGridSpec(
            num_scalar_prefetch=0,
            grid=(HW // thw,),
            in_specs=[
                pl.BlockSpec((B, thw, C), lambda k: (0, k, 0)),
                pl.BlockSpec((C, Cp), lambda k: (0, 0)),
                pl.BlockSpec((1, Cp), lambda k: (0, 0)),
                pl.BlockSpec((B, Cp), lambda k: (0, 0)),
            ],
            out_specs=(pl.BlockSpec((B, Cp), lambda k: (0, 0)),
                       pl.BlockSpec((1, 1), lambda k: (0, 0))),
            scratch_shapes=[pltpu.VMEM((B, C), jnp.float32)],
        ),
        compiler_params=_cparams(("arbitrary",)),
    )(x.reshape(B, HW, C), w_pad, b_pad, m_pad)
    return logits[:, :n], loss[0, 0]


# ----------------------------- SE-ResNet101 forward + loss -----------------------------

def se_bottleneck(x, p, stride):
    out = conv_bn(x, p["conv1"], stride=1, relu=True)
    out = conv_bn(out, p["conv2"], stride=stride, relu=True)
    out = conv_bn(out, p["conv3"], stride=1, relu=False)
    gate = se_gate(out, p["se_w1"], p["se_w2"])
    identity = conv_bn(x, p["downsample"], stride=stride, relu=False) if "downsample" in p else x
    return excite_add_relu(out, identity, gate)


def classifier_features(params, x_nhwc):
    x = conv_bn(x_nhwc, params["stem"], stride=2, relu=True)                   # 7x7/2
    x = max_pool_3x3_s2(x)                                                     # 3x3/2
    for layer, first_stride in zip(params["layers"], (1, 2, 2, 2)):
        for bi, bp in enumerate(layer):
            x = se_bottleneck(x, bp, first_stride if bi == 0 else 1)
    return x


def model_with_loss_forward(params, x_nchw, labels):
    assert x_nchw.shape[0] == labels.shape[0]
    x = jnp.transpose(x_nchw, (0, 2, 3, 1)).astype(jnp.bfloat16)               # NCHW -> NHWC, bf16
    feats = classifier_features(params, x)
    n_classes = params["fc_w"].shape[1]
    pos_mask = jnp.minimum(
        jax.nn.one_hot(labels, n_classes, dtype=jnp.float32).sum(axis=1), 1.0)
    logits, loss = head_loss(feats, params["fc_w"], params["fc_b"], pos_mask)
    return loss, logits


# ----------------------------- Deterministic parameter init -----------------------------

class _KeyGen:
    def __init__(self, key):
        self._key = key

    def __call__(self):
        self._key, sub = jax.random.split(self._key)
        return sub


def _conv_bn_params(kg, cout, cin, k):
    fan_in = cin * k * k
    return {
        "w": jax.random.normal(kg(), (cout, cin, k, k), jnp.float32) * (0.5 / jnp.sqrt(fan_in)),
        "gamma": 1.0 + 0.1 * jax.random.normal(kg(), (cout,), jnp.float32),
        "beta": 0.1 * jax.random.normal(kg(), (cout,), jnp.float32),
        "mean": 0.1 * jax.random.normal(kg(), (cout,), jnp.float32),
        "var": jnp.abs(1.0 + 0.1 * jax.random.normal(kg(), (cout,), jnp.float32)),
    }


def _bottleneck_params(kg, inplanes, planes, stride, reduction=16):
    c = planes * 4
    p = {
        "conv1": _conv_bn_params(kg, planes, inplanes, 1),
        "conv2": _conv_bn_params(kg, planes, planes, 3),
        "conv3": _conv_bn_params(kg, c, planes, 1),
        "se_w1": jax.random.normal(kg(), (c, c // reduction), jnp.float32) / jnp.sqrt(c),
        "se_w2": jax.random.normal(kg(), (c // reduction, c), jnp.float32) / jnp.sqrt(c // reduction),
    }
    if stride != 1 or inplanes != c:
        p["downsample"] = _conv_bn_params(kg, c, inplanes, 1)
    return p


def init_classifier_params(key, n_classes):
    kg = _KeyGen(key)
    params = {"stem": _conv_bn_params(kg, 64, 3, 7), "layers": []}
    inplanes = 64
    for planes, blocks, stride in ((64, 3, 1), (128, 4, 2), (256, 23, 2), (512, 3, 2)):
        layer = []
        for b in range(blocks):
            layer.append(_bottleneck_params(kg, inplanes, planes, stride if b == 0 else 1))
            inplanes = planes * 4
        params["layers"].append(layer)
    params["fc_w"] = jax.random.normal(kg(), (2048, n_classes), jnp.float32) / jnp.sqrt(2048.0)
    params["fc_b"] = 0.01 * jax.random.normal(kg(), (1, n_classes), jnp.float32)
    return params


# ----------------------------- main -----------------------------

if __name__ == "__main__":
    n_classes = 10
    key = jax.random.PRNGKey(0)
    pkey, xkey = jax.random.split(key)
    params = init_classifier_params(pkey, n_classes)

    x = jax.random.normal(xkey, (2, 3, 64, 64), jnp.float32)                   # NCHW, like PyTorch
    labels = jnp.array([[1, 4], [0, 7]], dtype=jnp.int32)                      # positives per sample

    loss, logits = model_with_loss_forward(params, x, labels)
    loss = jax.block_until_ready(loss)

    assert logits.shape == (2, n_classes), logits.shape
    assert bool(jnp.isfinite(loss)), loss
    assert bool(jnp.all(jnp.isfinite(logits)))
    print("KERNEL_OK")
</pallas_src>

<mosaic_0001>
module attributes {stable_mosaic.version = 11 : i64} {
  func.func @_matmul_bn_kernel(%arg0: i32, %arg1: i32, %arg2: i32, %arg3: memref<256x256xbf16, #tpu.memory_space<vmem>>, %arg4: memref<256x64xbf16, #tpu.memory_space<vmem>>, %arg5: memref<1x64xf32, #tpu.memory_space<vmem>>, %arg6: memref<256x64xbf16, #tpu.memory_space<vmem>>, %arg7: memref<256x64xf32, #tpu.memory_space<vmem>>) attributes {dimension_semantics = [#tpu.dimension_semantics<parallel>, #tpu.dimension_semantics<parallel>, #tpu.dimension_semantics<arbitrary>], iteration_bounds = array<i64: 8, 1, 1>, scalar_prefetch = 0 : i64, scratch_operands = 1 : i64, tpu.core_type = #tpu.core_type<tc>, window_params = [{transform_indices = @transform_0, window_bounds = array<i64: 256, 256>}, {transform_indices = @transform_1, window_bounds = array<i64: 256, 64>}, {transform_indices = @transform_2, window_bounds = array<i64: 1, 64>}, {transform_indices = @transform_3, window_bounds = array<i64: 256, 64>}]} {
    %c0_i32 = arith.constant 0 : i32
    %0 = arith.cmpi eq, %arg2, %c0_i32 : i32
    %1 = arith.extui %0 : i1 to i32
    %c0_i32_0 = arith.constant 0 : i32
    %2 = arith.cmpi ne, %1, %c0_i32_0 : i32
    scf.if %2 {
      %cst_10 = arith.constant 0.000000e+00 : f32
      %12 = vector.broadcast %cst_10 : f32 to vector<256x64xf32>
      %c0_11 = arith.constant 0 : index
      %c0_12 = arith.constant 0 : index
      %13 = vector.load %arg7[%c0_11, %c0_12] : memref<256x64xf32, #tpu.memory_space<vmem>>, vector<256x64xf32>
      tpu.vector_store %arg7[%c0_11, %c0_12], %12 {strides = array<i32>} : memref<256x64xf32, #tpu.memory_space<vmem>>, vector<256x64xf32>,
    } else {
    }
    %c0 = arith.constant 0 : index
    %c0_1 = arith.constant 0 : index
    %3 = vector.load %arg7[%c0, %c0_1] : memref<256x64xf32, #tpu.memory_space<vmem>>, vector<256x64xf32>
    %c0_2 = arith.constant 0 : index
    %c0_3 = arith.constant 0 : index
    %4 = vector.load %arg3[%c0_2, %c0_3] : memref<256x256xbf16, #tpu.memory_space<vmem>>, vector<256x256xbf16>
    %c0_4 = arith.constant 0 : index
    %c0_5 = arith.constant 0 : index
    %5 = vector.load %arg4[%c0_4, %c0_5] : memref<256x64xbf16, #tpu.memory_space<vmem>>, vector<256x64xbf16>
    %cst = arith.constant dense<0.000000e+00> : vector<256x64xf32>
    %6 = tpu.matmul %4, %5, %cst {dimension_numbers = #tpu.dot_dimension_numbers<[1], [0], [0], [1], [0, 0, 1, 1], [], []>} : vector<256x256xbf16>, vector<256x64xbf16>, vector<256x64xf32> -> vector<256x64xf32>
    %7 = arith.addf %3, %6 : vector<256x64xf32>
    %c0_6 = arith.constant 0 : index
    %c0_7 = arith.constant 0 : index
    %8 = vector.load %arg7[%c0_6, %c0_7] : memref<256x64xf32, #tpu.memory_space<vmem>>, vector<256x64xf32>
    tpu.vector_store %arg7[%c0_6, %c0_7], %7 {strides = array<i32>} : memref<256x64xf32, #tpu.memory_space<vmem>>, vector<256x64xf32>,
    %c0_i32_8 = arith.constant 0 : i32
    %9 = arith.cmpi eq, %arg2, %c0_i32_8 : i32
    %10 = arith.extui %9 : i1 to i32
    %c0_i32_9 = arith.constant 0 : i32
    %11 = arith.cmpi ne, %10, %c0_i32_9 : i32
    scf.if %11 {
      %c0_10 = arith.constant 0 : index
      %c0_11 = arith.constant 0 : index
      %12 = vector.load %arg7[%c0_10, %c0_11] : memref<256x64xf32, #tpu.memory_space<vmem>>, vector<256x64xf32>
      %c0_12 = arith.constant 0 : index
      %c0_13 = arith.constant 0 : index
      %13 = vector.load %arg5[%c0_12, %c0_13] : memref<1x64xf32, #tpu.memory_space<vmem>>, vector<1x64xf32>
      %14 = vector.broadcast %13 : vector<1x64xf32> to vector<256x64xf32>
      %15 = arith.addf %12, %14 : vector<256x64xf32>
      %cst_14 = arith.constant 0.000000e+00 : f32
      %16 = vector.broadcast %cst_14 : f32 to vector<256x64xf32>
      %17 = arith.maximumf %15, %16 : vector<256x64xf32>
      %18 = arith.truncf %17 : vector<256x64xf32> to vector<256x64xbf16>
      %c0_15 = arith.constant 0 : index
      %c0_16 = arith.constant 0 : index
      %19 = vector.load %arg6[%c0_15, %c0_16] : memref<256x64xbf16, #tpu.memory_space<vmem>>, vector<256x64xbf16>
      tpu.vector_store %arg6[%c0_15, %c0_16], %18 {strides = array<i32>} : memref<256x64xbf16, #tpu.memory_space<vmem>>, vector<256x64xbf16>,
    } else {
    }
    return
  }
  func.func @transform_0(%arg0: i32, %arg1: i32, %arg2: i32) -> (i32, i32) {
    %c0_i32 = arith.constant 0 : i32
    return %arg0, %arg2 : i32, i32
  }
  func.func @transform_1(%arg0: i32, %arg1: i32, %arg2: i32) -> (i32, i32) {
    %c0_i32 = arith.constant 0 : i32
    return %arg2, %arg1 : i32, i32
  }
  func.func @transform_2(%arg0: i32, %arg1: i32, %arg2: i32) -> (i32, i32) {
    %c0_i32 = arith.constant 0 : i32
    %c0_i32_0 = arith.constant 0 : i32
    return %c0_i32, %arg1 : i32, i32
  }
  func.func @transform_3(%arg0: i32, %arg1: i32, %arg2: i32) -> (i32, i32) {
    %c0_i32 = arith.constant 0 : i32
    return %arg0, %arg1 : i32, i32
  }
}

</mosaic_0001>

<llo_original>
// kernel: conv_bn.1
$region0: #{conv_bn.1}
  #allocation0 [shape = 'u32[]', space=smem, size = 0x4, offset = 0x4, fixed_abs, tag = 'smem constant byte address 0x4 - core index']
  #allocation1 [shape = 'u32[72,128]{1,0:T(1,128)}', space=vmem, size = 0x9000, scoped, tag = 'internal scratch']
  #allocation2 [shape = 'f32[256,64]{1,0:T(8,128)}', space=vmem, size = 0x20000, scoped, tag = 'scratch operand']
  %s0 = inlined_call_operand.vmem [shape: bf16[2048,256], index: 0, kind: input, shape index: {}]
  %s1 = inlined_call_operand.vmem [shape: bf16[256,64], index: 1, kind: input, shape index: {}]
  %s2 = inlined_call_operand.vmem [shape: f32[1,64], index: 2, kind: input, shape index: {}]
  %s3 = inlined_call_operand.hbm [shape: bf16[2048,64], index: 3, kind: output, shape index: {}]
  %s4 = sld [smem:[#allocation0]]
  $region53: #{conv_bn.1} parent=0
    _
  %s6 = ssub.s32 1, %s4
  %s7 = scalar_select 0, %s6, %s4
  $region1: #{conv_bn.1} parent=0
    #allocation3 [shape = 'u8[131072]{0}', space=vmem, size = 0x20000, scoped, tag = 'output window, operand 0']
    #allocation4 [shape = 's32[2]{0}', space=sflag, size = 0x8, scoped, tag = 'scoped memory for conv_bn.1']
    %8 = vsyncpa [#allocation4], 0
    %s9 = scalar_lea.sflag [#allocation4], 1
    %10 = vsyncpa %s9, 0
    loop: start=0, step=1, limit=10
    $region2: #{conv_bn.1} parent=1 // loop_pre_header
      _
    $region3: #{conv_bn.1} parent=1 // loop_header
      %s12 = sphi 0, %s16
      %p13 = scmp.ge.s32.totalorder %s12, 10
      %s19 = sphi 0, %s38
      %s20 = sphi 0, %s34
      %s21 = sphi 0, %s30
      %s22 = sphi 0, %s19
      %s23 = sphi 0, %s20
      %s24 = sphi 0, %s21
      %s25 = sphi 0, %s22
      %s26 = sphi 0, %s23
      %s27 = sphi 0, %s24
      %s43 = sphi 0, %s45
      %s46 = sphi 0, %s43
      %s47 = sphi 0, %s46
      %s63 = sphi 0, %s47
      %s71 = sphi 0, %s73
      %s74 = sphi 0, %s71
      %s75 = sphi 0, %s74
      %s91 = sphi 0, %s75
      %s97 = sphi 0, %s99
      %s100 = sphi 0, %s97
      %s101 = sphi 0, %s100
      %s117 = sphi 0, %s101
      %s125 = sphi 0, %s127
      %s128 = sphi 0, %s125
      %s129 = sphi 0, %s128
      %s145 = sphi 0, %s129
    $region4: #{conv_bn.1} parent=1 // loop_header_branch
      %15 = sbr.rel (%p13) target = $region8
    $region5: #{conv_bn.1} parent=1 // loop_body
      %s17 = ssub.s32 %s12, 1
      %s18 = ssub.s32 %s12, 2
      %s28 = sadd.s32 1, %s21
      %p29 = scmp.ge.s32.totalorder %s28, 1
      %s30 = scalar_select %p29, 0, %s28
      %s31 = sadd.s32 1, %s20
      %s32 = scalar_select %p29, %s31, %s20
      %p33 = scmp.ge.s32.totalorder %s32, 1
      %s34 = scalar_select %p33, 0, %s32
      %s35 = sadd.s32 1, %s19
      %s36 = scalar_select %p33, %s35, %s19
      %p37 = scmp.ge.s32.totalorder %s36, 8
      %s38 = scalar_select %p37, 0, %s36
      %s39 = ssub.s32 %s19, %s38
      %s40 = ssub.s32 %s21, %s30
      %s41 = sor.u32 %s39, %s40
      %p42 = scmp.eq.s32.totalorder %s41, 0
      %s44 = sadd.s32 %s43, 1
      %s45 = scalar_select %p42, %s43, %s44
      %p48 = pneg %p42
      %p49 = scmp.eq.s32.totalorder %s12, 7
      %p50 = por %p48, %p49
      %p51 = scmp.ne.s32.totalorder %s43, %s46
      %p52 = scmp.eq.s32.totalorder %s12, 0
      %p53 = por %p51, %p52
      %p54 = scmp.ne.s32.totalorder %s43, %s46
      %p55 = scmp.eq.s32.totalorder %s17, 7
      %p56 = por %p54, %p55
      %p57 = scmp.ne.s32.totalorder %s46, %s47
      %p58 = scmp.eq.s32.totalorder %s17, 0
      %p59 = por %p57, %p58
      %p60 = scmp.ne.s32.totalorder %s46, %s47
      %p61 = scmp.eq.s32.totalorder %s18, 7
      %p62 = por %p60, %p61
      %p64 = scmp.ne.s32.totalorder %s47, %s63
      %p65 = scmp.eq.s32.totalorder %s18, 0
      %p66 = por %p64, %p65
      %s67 = ssub.s32 %s21, %s30
      %s68 = ssub.s32 %s20, %s34
      %s69 = sor.u32 %s67, %s68
      %p70 = scmp.eq.s32.totalorder %s69, 0
      %s72 = sadd.s32 %s71, 1
      %s73 = scalar_select %p70, %s71, %s72
      %p76 = pneg %p70
      %p77 = scmp.eq.s32.totalorder %s12, 7
      %p78 = por %p76, %p77
      %p79 = scmp.ne.s32.totalorder %s71, %s74
      %p80 = scmp.eq.s32.totalorder %s12, 0
      %p81 = por %p79, %p80
      %p82 = scmp.ne.s32.totalorder %s71, %s74
      %p83 = scmp.eq.s32.totalorder %s17, 7
      %p84 = por %p82, %p83
      %p85 = scmp.ne.s32.totalorder %s74, %s75
      %p86 = scmp.eq.s32.totalorder %s17, 0
      %p87 = por %p85, %p86
      %p88 = scmp.ne.s32.totalorder %s74, %s75
      %p89 = scmp.eq.s32.totalorder %s18, 7
      %p90 = por %p88, %p89
      %p92 = scmp.ne.s32.totalorder %s75, %s91
      %p93 = scmp.eq.s32.totalorder %s18, 0
      %p94 = por %p92, %p93
      %s95 = ssub.s32 %s20, %s34
      %p96 = scmp.eq.s32.totalorder %s95, 0
      %s98 = sadd.s32 %s97, 1
      %s99 = scalar_select %p96, %s97, %s98
      %p102 = pneg %p96
      %p103 = scmp.eq.s32.totalorder %s12, 7
      %p104 = por %p102, %p103
      %p105 = scmp.ne.s32.totalorder %s97, %s100
      %p106 = scmp.eq.s32.totalorder %s12, 0
      %p107 = por %p105, %p106
      %p108 = scmp.ne.s32.totalorder %s97, %s100
      %p109 = scmp.eq.s32.totalorder %s17, 7
      %p110 = por %p108, %p109
      %p111 = scmp.ne.s32.totalorder %s100, %s101
      %p112 = scmp.eq.s32.totalorder %s17, 0
      %p113 = por %p111, %p112
      %p114 = scmp.ne.s32.totalorder %s100, %s101
      %p115 = scmp.eq.s32.totalorder %s18, 7
      %p116 = por %p114, %p115
      %p118 = scmp.ne.s32.totalorder %s101, %s117
      %p119 = scmp.eq.s32.totalorder %s18, 0
      %p120 = por %p118, %p119
      %s121 = ssub.s32 %s19, %s38
      %s122 = ssub.s32 %s20, %s34
      %s123 = sor.u32 %s121, %s122
      %p124 = scmp.eq.s32.totalorder %s123, 0
      %s126 = sadd.s32 %s125, 1
      %s127 = scalar_select %p124, %s125, %s126
      %p130 = pneg %p124
      %p131 = scmp.eq.s32.totalorder %s12, 7
      %p132 = por %p130, %p131
      %p133 = scmp.ne.s32.totalorder %s125, %s128
      %p134 = scmp.eq.s32.totalorder %s12, 0
      %p135 = por %p133, %p134
      %p136 = scmp.ne.s32.totalorder %s125, %s128
      %p137 = scmp.eq.s32.totalorder %s17, 7
      %p138 = por %p136, %p137
      %p139 = scmp.ne.s32.totalorder %s128, %s129
      %p140 = scmp.eq.s32.totalorder %s17, 0
      %p141 = por %p139, %p140
      %p142 = scmp.ne.s32.totalorder %s128, %s129
      %p143 = scmp.eq.s32.totalorder %s18, 7
      %p144 = por %p142, %p143
      %p146 = scmp.ne.s32.totalorder %s129, %s145
      %p147 = scmp.eq.s32.totalorder %s18, 0
      %p148 = por %p146, %p147
      %p149 = scmp.le.s32.totalorder 1, %s12
      %p150 = scmp.lt.s32.totalorder %s12, 9
      %p151 = pnand %p149, %p150
      %p152 = pneg %p151
      // Predicated region
      $region9: #{conv_bn.1} parent=5 // pred_check
        _
      $region10: #{conv_bn.1} parent=5 // pred_check_branch
        %154 = sbr.rel (%p151) target = $region12
      $region11: #{conv_bn.1} parent=5 // pred_region
        %s155 = ssub.s32 %s12, 1
        // Predicated region
        $region13: #{conv_bn.1} parent=11 // pred_check
          %p156 = pneg %p87
        $region14: #{conv_bn.1} parent=11 // pred_check_branch
          %158 = sbr.rel (%p156) target = $region16
        $region15: #{conv_bn.1} parent=11 // pred_region
          %s159 = smul.u32 32, %s24
          %p160 = scmp.lt.s32.totalorder %s159, 31
          %s161 = scalar_select %p160, %s159, 31
          %p162 = scmp.lt.s32.totalorder %s23, 0
          %s163 = scalar_select %p162, %s23, 0
          %s164 = sadd.s32 %s163, %s161
          %s165 = smul.addr %s164, 4
          %s166 = scalar_lea.vmem %s1, %s165
          %s167 = smul.u32 32, %s24
        $region16: #{conv_bn.1} parent=11 // pred_fallthru
          _
        // Predicated region
        $region17: #{conv_bn.1} parent=11 // pred_check
          %p168 = pneg %p113
        $region18: #{conv_bn.1} parent=11 // pred_check_branch
          %170 = sbr.rel (%p168) target = $region20
        $region19: #{conv_bn.1} parent=11 // pred_region
          %p171 = scmp.lt.s32.totalorder %s23, 0
          %s172 = scalar_select %p171, %s23, 0
          %s173 = scalar_lea.vmem %s2, %s172
        $region20: #{conv_bn.1} parent=11 // pred_fallthru
          _
      $region12: #{conv_bn.1} parent=5 // pred_fallthru
        _
      %p174 = scmp.lt.s32.totalorder %s12, 8
      // Predicated region
      $region21: #{conv_bn.1} parent=5 // pred_check
        %p175 = pneg %p174
      $region22: #{conv_bn.1} parent=5 // pred_check_branch
        %177 = sbr.rel (%p175) target = $region24
      $region23: #{conv_bn.1} parent=5 // pred_region
        // Predicated region
        $region25: #{conv_bn.1} parent=23 // pred_check
          %p178 = pneg %p53
        $region26: #{conv_bn.1} parent=23 // pred_check_branch
          %180 = sbr.rel (%p178) target = $region28
        $region27: #{conv_bn.1} parent=23 // pred_region
          %s181 = smul.u32 32, %s19
          %s182 = smul.u32 2, %s21
          %p183 = scmp.lt.s32.totalorder %s181, 255
          %s184 = scalar_select %p183, %s181, 255
          %p185 = scmp.lt.s32.totalorder %s182, 1
          %s186 = scalar_select %p185, %s182, 1
          %s187 = smul.addr %s184, 2
          %s188 = sadd.s32 %s186, %s187
          %s189 = smul.addr %s188, 4
          %s190 = scalar_lea.vmem %s0, %s189
          %s191 = smul.u32 32, %s19
          %s192 = smul.u32 2, %s21
        $region28: #{conv_bn.1} parent=23 // pred_fallthru
          _
      $region24: #{conv_bn.1} parent=5 // pred_fallthru
        _
      %p193 = scmp.le.s32.totalorder 1, %s12
      %p194 = scmp.lt.s32.totalorder %s12, 9
      %p195 = pnand %p193, %p194
      %p196 = pneg %p195
      // Predicated region
      $region29: #{conv_bn.1} parent=5 // pred_check
        _
      $region30: #{conv_bn.1} parent=5 // pred_check_branch
        %198 = sbr.rel (%p195) target = $region32
      $region31: #{conv_bn.1} parent=5 // pred_region
        %s199 = ssub.s32 %s12, 1
        %s200 = smul.u32 32, %s22
        %s201 = smul.u32 2, %s24
        %p202 = scmp.lt.s32.totalorder %s200, 255
        %s203 = scalar_select %p202, %s200, 255
        %p204 = scmp.lt.s32.totalorder %s201, 1
        %s205 = scalar_select %p204, %s201, 1
        %s206 = smul.addr %s203, 2
        %s207 = sadd.s32 %s205, %s206
        %s208 = smul.addr %s207, 4
        %s209 = scalar_lea.vmem %s0, %s208
        %p210 = pneg %p59
        %p211 = pneg %p56
        %s212 = smul.u32 32, %s24
        %p213 = scmp.lt.s32.totalorder %s212, 31
        %s214 = scalar_select %p213, %s212, 31
        %p215 = scmp.lt.s32.totalorder %s23, 0
        %s216 = scalar_select %p215, %s23, 0
        %s217 = sadd.s32 %s216, %s214
        %s218 = smul.addr %s217, 4
        %s219 = scalar_lea.vmem %s1, %s218
        %p220 = pneg %p87
        %p221 = pneg %p84
        %p222 = scmp.lt.s32.totalorder %s23, 0
        %s223 = scalar_select %p222, %s23, 0
        %s224 = scalar_lea.vmem %s2, %s223
        %p225 = pneg %p113
        %p226 = pneg %p110
        %p227 = pneg %p141
        %p228 = pneg %p138
        %s229 = sand.u32 %s128, 1
        %s230 = scalar_lea.sflag [#allocation4], %s229
        %s231 = sand.u32 %s128, 1
        %s232 = smul.addr %s231, 128
        %s233 = scalar_lea.vmem [#allocation3], %s232
        %s234 = smul.u32 32, %s22
        %s235 = smul.u32 2, %s24
        %p236 = scmp.lt.s32.totalorder %s234, 255
        %s237 = scalar_select %p236, %s234, 255
        %p238 = scmp.lt.s32.totalorder %s235, 1
        %s239 = scalar_select %p238, %s235, 1
        %s240 = smul.addr %s237, 2
        %s241 = sadd.s32 %s239, %s240
        %s242 = smul.addr %s241, 4
        %s243 = scalar_lea.vmem %s0, %s242
        %s244 = smul.u32 32, %s22
        %s245 = smul.u32 2, %s24
        %s246 = smul.u32 32, %s24
        %p247 = scmp.lt.s32.totalorder %s246, 31
        %s248 = scalar_select %p247, %s246, 31
        %p249 = scmp.lt.s32.totalorder %s23, 0
        %s250 = scalar_select %p249, %s23, 0
        %s251 = sadd.s32 %s250, %s248
        %s252 = smul.addr %s251, 4
        %s253 = scalar_lea.vmem %s1, %s252
        %s254 = smul.u32 32, %s24
        %p255 = scmp.lt.s32.totalorder %s23, 0
        %s256 = scalar_select %p255, %s23, 0
        %s257 = scalar_lea.vmem %s2, %s256
        %s258 = smul.u32 32, %s22
        %p259 = scmp.eq.s32.totalorder %s24, 0
        // Predicated region
        $region33: #{conv_bn.1} parent=31 // pred_check
          %p260 = pneg %p259
        $region34: #{conv_bn.1} parent=31 // pred_check_branch
          %262 = sbr.rel (%p260) target = $region36
        $region35: #{conv_bn.1} parent=31 // pred_region
          %vm263 = vcmask 523264
          %264 = vst.msk [vmem:[#allocation2] sm:$0xff] %vm263, 0.0
          %265 = vst.msk [vmem:[#allocation2 + $0x8] sm:$0xff] %vm263, 0.0
          %266 = vst.msk [vmem:[#allocation2 + $0x10] sm:$0xff] %vm263, 0.0
          %267 = vst.msk [vmem:[#allocation2 + $0x18] sm:$0xff] %vm263, 0.0
          %268 = vst.msk [vmem:[#allocation2 + $0x20] sm:$0xff] %vm263, 0.0
          %269 = vst.msk [vmem:[#allocation2 + $0x28] sm:$0xff] %vm263, 0.0
          %270 = vst.msk [vmem:[#allocation2 + $0x30] sm:$0xff] %vm263, 0.0
          %271 = vst.msk [vmem:[#allocation2 + $0x38] sm:$0xff] %vm263, 0.0
          %272 = vst.msk [vmem:[#allocation2 + $0x40] sm:$0xff] %vm263, 0.0
          %273 = vst.msk [vmem:[#allocation2 + $0x48] sm:$0xff] %vm263, 0.0
          %274 = vst.msk [vmem:[#allocation2 + $0x50] sm:$0xff] %vm263, 0.0
          %275 = vst.msk [vmem:[#allocation2 + $0x58] sm:$0xff] %vm263, 0.0
          %276 = vst.msk [vmem:[#allocation2 + $0x60] sm:$0xff] %vm263, 0.0
          %277 = vst.msk [vmem:[#allocation2 + $0x68] sm:$0xff] %vm263, 0.0
          %278 = vst.msk [vmem:[#allocation2 + $0x70] sm:$0xff] %vm263, 0.0
          %279 = vst.msk [vmem:[#allocation2 + $0x78] sm:$0xff] %vm263, 0.0
          %280 = vst.msk [vmem:[#allocation2 + $0x80] sm:$0xff] %vm263, 0.0
          %281 = vst.msk [vmem:[#allocation2 + $0x88] sm:$0xff] %vm263, 0.0
          %282 = vst.msk [vmem:[#allocation2 + $0x90] sm:$0xff] %vm263, 0.0
          %283 = vst.msk [vmem:[#allocation2 + $0x98] sm:$0xff] %vm263, 0.0
          %284 = vst.msk [vmem:[#allocation2 + $0xa0] sm:$0xff] %vm263, 0.0
          %285 = vst.msk [vmem:[#allocation2 + $0xa8] sm:$0xff] %vm263, 0.0
          %286 = vst.msk [vmem:[#allocation2 + $0xb0] sm:$0xff] %vm263, 0.0
          %287 = vst.msk [vmem:[#allocation2 + $0xb8] sm:$0xff] %vm263, 0.0
          %288 = vst.msk [vmem:[#allocation2 + $0xc0] sm:$0xff] %vm263, 0.0
          %289 = vst.msk [vmem:[#allocation2 + $0xc8] sm:$0xff] %vm263, 0.0
          %290 = vst.msk [vmem:[#allocation2 + $0xd0] sm:$0xff] %vm263, 0.0
          %291 = vst.msk [vmem:[#allocation2 + $0xd8] sm:$0xff] %vm263, 0.0
          %292 = vst.msk [vmem:[#allocation2 + $0xe0] sm:$0xff] %vm263, 0.0
          %293 = vst.msk [vmem:[#allocation2 + $0xe8] sm:$0xff] %vm263, 0.0
          %294 = vst.msk [vmem:[#allocation2 + $0xf0] sm:$0xff] %vm263, 0.0
          %295 = vst.msk [vmem:[#allocation2 + $0xf8] sm:$0xff] %vm263, 0.0
        $region36: #{conv_bn.1} parent=31 // pred_fallthru
          _
        %v296 = vld [vmem:[#allocation2] sm:$0xff]
        %v297 = vld [vmem:[#allocation2 + $0x8] sm:$0xff]
        %v298 = vld [vmem:[#allocation2 + $0x10] sm:$0xff]
        %v299 = vld [vmem:[#allocation2 + $0x18] sm:$0xff]
        %v300 = vld [vmem:[#allocation2 + $0x20] sm:$0xff]
        %v301 = vld [vmem:[#allocation2 + $0x28] sm:$0xff]
        %v302 = vld [vmem:[#allocation2 + $0x30] sm:$0xff]
        %v303 = vld [vmem:[#allocation2 + $0x38] sm:$0xff]
        %v304 = vld [vmem:[#allocation2 + $0x40] sm:$0xff]
        %v305 = vld [vmem:[#allocation2 + $0x48] sm:$0xff]
        %v306 = vld [vmem:[#allocation2 + $0x50] sm:$0xff]
        %v307 = vld [vmem:[#allocation2 + $0x58] sm:$0xff]
        %v308 = vld [vmem:[#allocation2 + $0x60] sm:$0xff]
        %v309 = vld [vmem:[#allocation2 + $0x68] sm:$0xff]
        %v310 = vld [vmem:[#allocation2 + $0x70] sm:$0xff]
        %v311 = vld [vmem:[#allocation2 + $0x78] sm:$0xff]
        %v312 = vld [vmem:[#allocation2 + $0x80] sm:$0xff]
        %v313 = vld [vmem:[#allocation2 + $0x88] sm:$0xff]
        %v314 = vld [vmem:[#allocation2 + $0x90] sm:$0xff]
        %v315 = vld [vmem:[#allocation2 + $0x98] sm:$0xff]
        %v316 = vld [vmem:[#allocation2 + $0xa0] sm:$0xff]
        %v317 = vld [vmem:[#allocation2 + $0xa8] sm:$0xff]
        %v318 = vld [vmem:[#allocation2 + $0xb0] sm:$0xff]
        %v319 = vld [vmem:[#allocation2 + $0xb8] sm:$0xff]
        %v320 = vld [vmem:[#allocation2 + $0xc0] sm:$0xff]
        %v321 = vld [vmem:[#allocation2 + $0xc8] sm:$0xff]
        %v322 = vld [vmem:[#allocation2 + $0xd0] sm:$0xff]
        %v323 = vld [vmem:[#allocation2 + $0xd8] sm:$0xff]
        %v324 = vld [vmem:[#allocation2 + $0xe0] sm:$0xff]
        %v325 = vld [vmem:[#allocation2 + $0xe8] sm:$0xff]
        %v326 = vld [vmem:[#allocation2 + $0xf0] sm:$0xff]
        %v327 = vld [vmem:[#allocation2 + $0xf8] sm:$0xff]
        %v328 = vld [vmem:[%s243] sm:$0xff]
        %v329 = vld [vmem:[%s243 + $0x8] sm:$0xff]
        %v330 = vld [vmem:[%s243 + $0x10] sm:$0xff]
        %v331 = vld [vmem:[%s243 + $0x18] sm:$0xff]
        %v332 = vld [vmem:[%s243 + $0x20] sm:$0xff]
        %v333 = vld [vmem:[%s243 + $0x28] sm:$0xff]
        %v334 = vld [vmem:[%s243 + $0x30] sm:$0xff]
        %v335 = vld [vmem:[%s243 + $0x38] sm:$0xff]
        %v336 = vld [vmem:[%s243 + $0x40] sm:$0xff]
        %v337 = vld [vmem:[%s243 + $0x48] sm:$0xff]
        %v338 = vld [vmem:[%s243 + $0x50] sm:$0xff]
        %v339 = vld [vmem:[%s243 + $0x58] sm:$0xff]
        %v340 = vld [vmem:[%s243 + $0x60] sm:$0xff]
        %v341 = vld [vmem:[%s243 + $0x68] sm:$0xff]
        %v342 = vld [vmem:[%s243 + $0x70] sm:$0xff]
        %v343 = vld [vmem:[%s243 + $0x78] sm:$0xff]
        %v344 = vld [vmem:[%s243 + $0x80] sm:$0xff]
        %v345 = vld [vmem:[%s243 + $0x88] sm:$0xff]
        %v346 = vld [vmem:[%s243 + $0x90] sm:$0xff]
        %v347 = vld [vmem:[%s243 + $0x98] sm:$0xff]
        %v348 = vld [vmem:[%s243 + $0xa0] sm:$0xff]
        %v349 = vld [vmem:[%s243 + $0xa8] sm:$0xff]
        %v350 = vld [vmem:[%s243 + $0xb0] sm:$0xff]
        %v351 = vld [vmem:[%s243 + $0xb8] sm:$0xff]
        %v352 = vld [vmem:[%s243 + $0xc0] sm:$0xff]
        %v353 = vld [vmem:[%s243 + $0xc8] sm:$0xff]
        %v354 = vld [vmem:[%s243 + $0xd0] sm:$0xff]
        %v355 = vld [vmem:[%s243 + $0xd8] sm:$0xff]
        %v356 = vld [vmem:[%s243 + $0xe0] sm:$0xff]
        %v357 = vld [vmem:[%s243 + $0xe8] sm:$0xff]
        %v358 = vld [vmem:[%s243 + $0xf0] sm:$0xff]
        %v359 = vld [vmem:[%s243 + $0xf8] sm:$0xff]
        %v360 = vld [vmem:[%s253] sm:$0xf]
        %v361 = vld [vmem:[%s253 + $0x4] sm:$0xf]
        %v362 = vld [vmem:[%s253 + $0x8] sm:$0xf]
        %v363 = vld [vmem:[%s253 + $0xc] sm:$0xf]
        %v364 = vld [vmem:[%s253 + $0x10] sm:$0xf]
        %v365 = vld [vmem:[%s253 + $0x14] sm:$0xf]
        %v366 = vld [vmem:[%s253 + $0x18] sm:$0xf]
        %v367 = vld [vmem:[%s253 + $0x1c] sm:$0xf]
        %v368 = vld [vmem:[%s253 + $0x20] sm:$0xf]
        %v369 = vld [vmem:[%s253 + $0x24] sm:$0xf]
        %v370 = vld [vmem:[%s253 + $0x28] sm:$0xf]
        %v371 = vld [vmem:[%s253 + $0x2c] sm:$0xf]
        %v372 = vld [vmem:[%s253 + $0x30] sm:$0xf]
        %v373 = vld [vmem:[%s253 + $0x34] sm:$0xf]
        %v374 = vld [vmem:[%s253 + $0x38] sm:$0xf]
        %v375 = vld [vmem:[%s253 + $0x3c] sm:$0xf]
        %v376 = vld [vmem:[%s253 + $0x40] sm:$0xf]
        %v377 = vld [vmem:[%s253 + $0x44] sm:$0xf]
        %v378 = vld [vmem:[%s253 + $0x48] sm:$0xf]
        %v379 = vld [vmem:[%s253 + $0x4c] sm:$0xf]
        %v380 = vld [vmem:[%s253 + $0x50] sm:$0xf]
        %v381 = vld [vmem:[%s253 + $0x54] sm:$0xf]
        %v382 = vld [vmem:[%s253 + $0x58] sm:$0xf]
        %v383 = vld [vmem:[%s253 + $0x5c] sm:$0xf]
        %v384 = vld [vmem:[%s253 + $0x60] sm:$0xf]
        %v385 = vld [vmem:[%s253 + $0x64] sm:$0xf]
        %v386 = vld [vmem:[%s253 + $0x68] sm:$0xf]
        %v387 = vld [vmem:[%s253 + $0x6c] sm:$0xf]
        %v388 = vld [vmem:[%s253 + $0x70] sm:$0xf]
        %v389 = vld [vmem:[%s253 + $0x74] sm:$0xf]
        %v390 = vld [vmem:[%s253 + $0x78] sm:$0xf]
        %v391 = vld [vmem:[%s253 + $0x7c] sm:$0xf]
        %v424 = vunpack.c.l.b16 %v328
        %v425 = vunpack.c.h.b16 %v328
        %v426 = vunpack.c.l.b16 %v329
        %v427 = vunpack.c.h.b16 %v329
        %v428 = vunpack.c.l.b16 %v330
        %v429 = vunpack.c.h.b16 %v330
        %v430 = vunpack.c.l.b16 %v331
        %v431 = vunpack.c.h.b16 %v331
        %v432 = vunpack.c.l.b16 %v332
        %v433 = vunpack.c.h.b16 %v332
        %v434 = vunpack.c.l.b16 %v333
        %v435 = vunpack.c.h.b16 %v333
        %v436 = vunpack.c.l.b16 %v334
        %v437 = vunpack.c.h.b16 %v334
        %v438 = vunpack.c.l.b16 %v335
        %v439 = vunpack.c.h.b16 %v335
        %v440 = vunpack.c.l.b16 %v336
        %v441 = vunpack.c.h.b16 %v336
        %v442 = vunpack.c.l.b16 %v337
        %v443 = vunpack.c.h.b16 %v337
        %v444 = vunpack.c.l.b16 %v338
        %v445 = vunpack.c.h.b16 %v338
        %v446 = vunpack.c.l.b16 %v339
        %v447 = vunpack.c.h.b16 %v339
        %v448 = vunpack.c.l.b16 %v340
        %v449 = vunpack.c.h.b16 %v340
        %v450 = vunpack.c.l.b16 %v341
        %v451 = vunpack.c.h.b16 %v341
        %v452 = vunpack.c.l.b16 %v342
        %v453 = vunpack.c.h.b16 %v342
        %v454 = vunpack.c.l.b16 %v343
        %v455 = vunpack.c.h.b16 %v343
        %v456 = vunpack.c.l.b16 %v344
        %v457 = vunpack.c.h.b16 %v344
        %v458 = vunpack.c.l.b16 %v345
        %v459 = vunpack.c.h.b16 %v345
        %v460 = vunpack.c.l.b16 %v346
        %v461 = vunpack.c.h.b16 %v346
        %v462 = vunpack.c.l.b16 %v347
        %v463 = vunpack.c.h.b16 %v347
        %v464 = vunpack.c.l.b16 %v348
        %v465 = vunpack.c.h.b16 %v348
        %v466 = vunpack.c.l.b16 %v349
        %v467 = vunpack.c.h.b16 %v349
        %v468 = vunpack.c.l.b16 %v350
        %v469 = vunpack.c.h.b16 %v350
        %v470 = vunpack.c.l.b16 %v351
        %v471 = vunpack.c.h.b16 %v351
        %v472 = vunpack.c.l.b16 %v352
        %v473 = vunpack.c.h.b16 %v352
        %v474 = vunpack.c.l.b16 %v353
        %v475 = vunpack.c.h.b16 %v353
        %v476 = vunpack.c.l.b16 %v354
        %v477 = vunpack.c.h.b16 %v354
        %v478 = vunpack.c.l.b16 %v355
        %v479 = vunpack.c.h.b16 %v355
        %v480 = vunpack.c.l.b16 %v356
        %v481 = vunpack.c.h.b16 %v356
        %v482 = vunpack.c.l.b16 %v357
        %v483 = vunpack.c.h.b16 %v357
        %v484 = vunpack.c.l.b16 %v358
        %v485 = vunpack.c.h.b16 %v358
        %v486 = vunpack.c.l.b16 %v359
        %v487 = vunpack.c.h.b16 %v359
        %v488 = vpack.c.b16 %v426, %v424
        %v489 = vpack.c.b16 %v427, %v425
        %v490 = vpack.c.b16 %v430, %v428
        %v491 = vpack.c.b16 %v431, %v429
        %v492 = vpack.c.b16 %v434, %v432
        %v493 = vpack.c.b16 %v435, %v433
        %v494 = vpack.c.b16 %v438, %v436
        %v495 = vpack.c.b16 %v439, %v437
        %v496 = vpack.c.b16 %v442, %v440
        %v497 = vpack.c.b16 %v443, %v441
        %v498 = vpack.c.b16 %v446, %v444
        %v499 = vpack.c.b16 %v447, %v445
        %v500 = vpack.c.b16 %v450, %v448
        %v501 = vpack.c.b16 %v451, %v449
        %v502 = vpack.c.b16 %v454, %v452
        %v503 = vpack.c.b16 %v455, %v453
        %v504 = vpack.c.b16 %v458, %v456
        %v505 = vpack.c.b16 %v459, %v457
        %v506 = vpack.c.b16 %v462, %v460
        %v507 = vpack.c.b16 %v463, %v461
        %v508 = vpack.c.b16 %v466, %v464
        %v509 = vpack.c.b16 %v467, %v465
        %v510 = vpack.c.b16 %v470, %v468
        %v511 = vpack.c.b16 %v471, %v469
        %v512 = vpack.c.b16 %v474, %v472
        %v513 = vpack.c.b16 %v475, %v473
        %v514 = vpack.c.b16 %v478, %v476
        %v515 = vpack.c.b16 %v479, %v477
        %v516 = vpack.c.b16 %v482, %v480
        %v517 = vpack.c.b16 %v483, %v481
        %v518 = vpack.c.b16 %v486, %v484
        %v519 = vpack.c.b16 %v487, %v485
        %v584 = vunpack.c.l.b16 %v360
        %v585 = vunpack.c.l.b16 %v361
        %v586 = vunpack.c.l.b16 %v362
        %v587 = vunpack.c.l.b16 %v363
        %v588 = vunpack.c.l.b16 %v364
        %v589 = vunpack.c.l.b16 %v365
        %v590 = vunpack.c.l.b16 %v366
        %v591 = vunpack.c.l.b16 %v367
        %v592 = vunpack.c.l.b16 %v368
        %v593 = vunpack.c.l.b16 %v369
        %v594 = vunpack.c.l.b16 %v370
        %v595 = vunpack.c.l.b16 %v371
        %v596 = vunpack.c.l.b16 %v372
        %v597 = vunpack.c.l.b16 %v373
        %v598 = vunpack.c.l.b16 %v374
        %v599 = vunpack.c.l.b16 %v375
        %v600 = vunpack.c.l.b16 %v376
        %v601 = vunpack.c.l.b16 %v377
        %v602 = vunpack.c.l.b16 %v378
        %v603 = vunpack.c.l.b16 %v379
        %v604 = vunpack.c.l.b16 %v380
        %v605 = vunpack.c.l.b16 %v381
        %v606 = vunpack.c.l.b16 %v382
        %v607 = vunpack.c.l.b16 %v383
        %v608 = vunpack.c.l.b16 %v384
        %v609 = vunpack.c.l.b16 %v385
        %v610 = vunpack.c.l.b16 %v386
        %v611 = vunpack.c.l.b16 %v387
        %v612 = vunpack.c.l.b16 %v388
        %v613 = vunpack.c.l.b16 %v389
        %v614 = vunpack.c.l.b16 %v390
        %v615 = vunpack.c.l.b16 %v391
        %v616 = vpack.c.b16 %v585, %v584
        %v617 = vpack.c.b16 %v587, %v586
        %v618 = vpack.c.b16 %v589, %v588
        %v619 = vpack.c.b16 %v591, %v590
        %v620 = vpack.c.b16 %v593, %v592
        %v621 = vpack.c.b16 %v595, %v594
        %v622 = vpack.c.b16 %v597, %v596
        %v623 = vpack.c.b16 %v599, %v598
        %v624 = vpack.c.b16 %v601, %v600
        %v625 = vpack.c.b16 %v603, %v602
        %v626 = vpack.c.b16 %v605, %v604
        %v627 = vpack.c.b16 %v607, %v606
        %v628 = vpack.c.b16 %v609, %v608
        %v629 = vpack.c.b16 %v611, %v610
        %v630 = vpack.c.b16 %v613, %v612
        %v631 = vpack.c.b16 %v615, %v614
        %648 = vmatpush.bf16.msra.mxu0 %v623
        %649 = vmatpush.bf16.msra.mxu0 %v622
        %650 = vmatpush.bf16.msra.mxu0 %v621
        %651 = vmatpush.bf16.msra.mxu0 %v620
        %652 = vmatpush.bf16.msra.mxu0 %v619
        %653 = vmatpush.bf16.msra.mxu0 %v618
        %654 = vmatpush.bf16.msra.mxu0 %v617
        %655 = vmatpush.bf16.msra.mxu0 %v616
        %656 = vmatmul.bf16.gmra.mxu0 %v488
        %v657 = vpop.f32.mrf.mxu0
        %v658 = vadd.f32 0.0, %v657
        %v659 = vpop.f32.mrf.mxu0
        %v660 = vadd.f32 0.0, %v659
        %661 = vmatmul.bf16.gmra.mxu0 %v490
        %v662 = vpop.f32.mrf.mxu0
        %v663 = vadd.f32 0.0, %v662
        %v664 = vpop.f32.mrf.mxu0
        %v665 = vadd.f32 0.0, %v664
        %666 = vmatmul.bf16.gmra.mxu0 %v492
        %v667 = vpop.f32.mrf.mxu0
        %v668 = vadd.f32 0.0, %v667
        %v669 = vpop.f32.mrf.mxu0
        %v670 = vadd.f32 0.0, %v669
        %671 = vmatmul.bf16.gmra.mxu0 %v494
        %v672 = vpop.f32.mrf.mxu0
        %v673 = vadd.f32 0.0, %v672
        %v674 = vpop.f32.mrf.mxu0
        %v675 = vadd.f32 0.0, %v674
        %676 = vmatmul.bf16.gmra.mxu0 %v496
        %v677 = vpop.f32.mrf.mxu0
        %v678 = vadd.f32 0.0, %v677
        %v679 = vpop.f32.mrf.mxu0
        %v680 = vadd.f32 0.0, %v679
        %681 = vmatmul.bf16.gmra.mxu0 %v498
        %v682 = vpop.f32.mrf.mxu0
        %v683 = vadd.f32 0.0, %v682
        %v684 = vpop.f32.mrf.mxu0
        %v685 = vadd.f32 0.0, %v684
        %686 = vmatmul.bf16.gmra.mxu0 %v500
        %v687 = vpop.f32.mrf.mxu0
        %v688 = vadd.f32 0.0, %v687
        %v689 = vpop.f32.mrf.mxu0
        %v690 = vadd.f32 0.0, %v689
        %691 = vmatmul.bf16.gmra.mxu0 %v502
        %v692 = vpop.f32.mrf.mxu0
        %v693 = vadd.f32 0.0, %v692
        %v694 = vpop.f32.mrf.mxu0
        %v695 = vadd.f32 0.0, %v694
        %696 = vmatmul.bf16.gmra.mxu0 %v504
        %v697 = vpop.f32.mrf.mxu0
        %v698 = vadd.f32 0.0, %v697
        %v699 = vpop.f32.mrf.mxu0
        %v700 = vadd.f32 0.0, %v699
        %701 = vmatmul.bf16.gmra.mxu0 %v506
        %v702 = vpop.f32.mrf.mxu0
        %v703 = vadd.f32 0.0, %v702
        %v704 = vpop.f32.mrf.mxu0
        %v705 = vadd.f32 0.0, %v704
        %706 = vmatmul.bf16.gmra.mxu0 %v508
        %v707 = vpop.f32.mrf.mxu0
        %v708 = vadd.f32 0.0, %v707
        %v709 = vpop.f32.mrf.mxu0
        %v710 = vadd.f32 0.0, %v709
        %711 = vmatmul.bf16.gmra.mxu0 %v510
        %v712 = vpop.f32.mrf.mxu0
        %v713 = vadd.f32 0.0, %v712
        %v714 = vpop.f32.mrf.mxu0
        %v715 = vadd.f32 0.0, %v714
        %716 = vmatmul.bf16.gmra.mxu0 %v512
        %v717 = vpop.f32.mrf.mxu0
        %v718 = vadd.f32 0.0, %v717
        %v719 = vpop.f32.mrf.mxu0
        %v720 = vadd.f32 0.0, %v719
        %721 = vmatmul.bf16.gmra.mxu0 %v514
        %v722 = vpop.f32.mrf.mxu0
        %v723 = vadd.f32 0.0, %v722
        %v724 = vpop.f32.mrf.mxu0
        %v725 = vadd.f32 0.0, %v724
        %726 = vmatmul.bf16.gmra.mxu0 %v516
        %v727 = vpop.f32.mrf.mxu0
        %v728 = vadd.f32 0.0, %v727
        %v729 = vpop.f32.mrf.mxu0
        %v730 = vadd.f32 0.0, %v729
        %731 = vmatmul.bf16.gmra.mxu0 %v518
        %v732 = vpop.f32.mrf.mxu0
        %v733 = vadd.f32 0.0, %v732
        %v734 = vpop.f32.mrf.mxu0
        %v735 = vadd.f32 0.0, %v734
        %736 = vdwg.mxu0
        %737 = vmatpush.bf16.msra.mxu0 %v631
        %738 = vmatpush.bf16.msra.mxu0 %v630
        %739 = vmatpush.bf16.msra.mxu0 %v629
        %740 = vmatpush.bf16.msra.mxu0 %v628
        %741 = vmatpush.bf16.msra.mxu0 %v627
        %742 = vmatpush.bf16.msra.mxu0 %v626
        %743 = vmatpush.bf16.msra.mxu0 %v625
        %744 = vmatpush.bf16.msra.mxu0 %v624
        %745 = vmatmul.bf16.gmra.mxu0 %v489
        %v746 = vpop.f32.mrf.mxu0
        %v747 = vadd.f32 %v658, %v746
        %v748 = vpop.f32.mrf.mxu0
        %v749 = vadd.f32 %v660, %v748
        %750 = vmatmul.bf16.gmra.mxu0 %v491
        %v751 = vpop.f32.mrf.mxu0
        %v752 = vadd.f32 %v663, %v751
        %v753 = vpop.f32.mrf.mxu0
        %v754 = vadd.f32 %v665, %v753
        %755 = vmatmul.bf16.gmra.mxu0 %v493
        %v756 = vpop.f32.mrf.mxu0
        %v757 = vadd.f32 %v668, %v756
        %v758 = vpop.f32.mrf.mxu0
        %v759 = vadd.f32 %v670, %v758
        %760 = vmatmul.bf16.gmra.mxu0 %v495
        %v761 = vpop.f32.mrf.mxu0
        %v762 = vadd.f32 %v673, %v761
        %v763 = vpop.f32.mrf.mxu0
        %v764 = vadd.f32 %v675, %v763
        %765 = vmatmul.bf16.gmra.mxu0 %v497
        %v766 = vpop.f32.mrf.mxu0
        %v767 = vadd.f32 %v678, %v766
        %v768 = vpop.f32.mrf.mxu0
        %v769 = vadd.f32 %v680, %v768
        %770 = vmatmul.bf16.gmra.mxu0 %v499
        %v771 = vpop.f32.mrf.mxu0
        %v772 = vadd.f32 %v683, %v771
        %v773 = vpop.f32.mrf.mxu0
        %v774 = vadd.f32 %v685, %v773
        %775 = vmatmul.bf16.gmra.mxu0 %v501
        %v776 = vpop.f32.mrf.mxu0
        %v777 = vadd.f32 %v688, %v776
        %v778 = vpop.f32.mrf.mxu0
        %v779 = vadd.f32 %v690, %v778
        %780 = vmatmul.bf16.gmra.mxu0 %v503
        %v781 = vpop.f32.mrf.mxu0
        %v782 = vadd.f32 %v693, %v781
        %v783 = vpop.f32.mrf.mxu0
        %v784 = vadd.f32 %v695, %v783
        %785 = vmatmul.bf16.gmra.mxu0 %v505
        %v786 = vpop.f32.mrf.mxu0
        %v787 = vadd.f32 %v698, %v786
        %v788 = vpop.f32.mrf.mxu0
        %v789 = vadd.f32 %v700, %v788
        %790 = vmatmul.bf16.gmra.mxu0 %v507
        %v791 = vpop.f32.mrf.mxu0
        %v792 = vadd.f32 %v703, %v791
        %v793 = vpop.f32.mrf.mxu0
        %v794 = vadd.f32 %v705, %v793
        %795 = vmatmul.bf16.gmra.mxu0 %v509
        %v796 = vpop.f32.mrf.mxu0
        %v797 = vadd.f32 %v708, %v796
        %v798 = vpop.f32.mrf.mxu0
        %v799 = vadd.f32 %v710, %v798
        %800 = vmatmul.bf16.gmra.mxu0 %v511
        %v801 = vpop.f32.mrf.mxu0
        %v802 = vadd.f32 %v713, %v801
        %v803 = vpop.f32.mrf.mxu0
        %v804 = vadd.f32 %v715, %v803
        %805 = vmatmul.bf16.gmra.mxu0 %v513
        %v806 = vpop.f32.mrf.mxu0
        %v807 = vadd.f32 %v718, %v806
        %v808 = vpop.f32.mrf.mxu0
        %v809 = vadd.f32 %v720, %v808
        %810 = vmatmul.bf16.gmra.mxu0 %v515
        %v811 = vpop.f32.mrf.mxu0
        %v812 = vadd.f32 %v723, %v811
        %v813 = vpop.f32.mrf.mxu0
        %v814 = vadd.f32 %v725, %v813
        %815 = vmatmul.bf16.gmra.mxu0 %v517
        %v816 = vpop.f32.mrf.mxu0
        %v817 = vadd.f32 %v728, %v816
        %v818 = vpop.f32.mrf.mxu0
        %v819 = vadd.f32 %v730, %v818
        %820 = vmatmul.bf16.gmra.mxu0 %v519
        %v821 = vpop.f32.mrf.mxu0
        %v822 = vadd.f32 %v733, %v821
        %v823 = vpop.f32.mrf.mxu0
        %v824 = vadd.f32 %v735, %v823
        %825 = vdwg.mxu0
        %v826 = vadd.f32 %v296, %v747
        %v827 = vadd.f32 %v297, %v749
        %v828 = vadd.f32 %v298, %v752
        %v829 = vadd.f32 %v299, %v754
        %v830 = vadd.f32 %v300, %v757
        %v831 = vadd.f32 %v301, %v759
        %v832 = vadd.f32 %v302, %v762
        %v833 = vadd.f32 %v303, %v764
        %v834 = vadd.f32 %v304, %v767
        %v835 = vadd.f32 %v305, %v769
        %v836 = vadd.f32 %v306, %v772
        %v837 = vadd.f32 %v307, %v774
        %v838 = vadd.f32 %v308, %v777
        %v839 = vadd.f32 %v309, %v779
        %v840 = vadd.f32 %v310, %v782
        %v841 = vadd.f32 %v311, %v784
        %v842 = vadd.f32 %v312, %v787
        %v843 = vadd.f32 %v313, %v789
        %v844 = vadd.f32 %v314, %v792
        %v845 = vadd.f32 %v315, %v794
        %v846 = vadd.f32 %v316, %v797
        %v847 = vadd.f32 %v317, %v799
        %v848 = vadd.f32 %v318, %v802
        %v849 = vadd.f32 %v319, %v804
        %v850 = vadd.f32 %v320, %v807
        %v851 = vadd.f32 %v321, %v809
        %v852 = vadd.f32 %v322, %v812
        %v853 = vadd.f32 %v323, %v814
        %v854 = vadd.f32 %v324, %v817
        %v855 = vadd.f32 %v325, %v819
        %v856 = vadd.f32 %v326, %v822
        %v857 = vadd.f32 %v327, %v824
        %vm858 = vcmask 523264
        %859 = vst.msk [vmem:[#allocation2] sm:$0xff] %vm858, %v826
        %860 = vst.msk [vmem:[#allocation2 + $0x8] sm:$0xff] %vm858, %v827
        %861 = vst.msk [vmem:[#allocation2 + $0x10] sm:$0xff] %vm858, %v828
        %862 = vst.msk [vmem:[#allocation2 + $0x18] sm:$0xff] %vm858, %v829
        %863 = vst.msk [vmem:[#allocation2 + $0x20] sm:$0xff] %vm858, %v830
        %864 = vst.msk [vmem:[#allocation2 + $0x28] sm:$0xff] %vm858, %v831
        %865 = vst.msk [vmem:[#allocation2 + $0x30] sm:$0xff] %vm858, %v832
        %866 = vst.msk [vmem:[#allocation2 + $0x38] sm:$0xff] %vm858, %v833
        %867 = vst.msk [vmem:[#allocation2 + $0x40] sm:$0xff] %vm858, %v834
        %868 = vst.msk [vmem:[#allocation2 + $0x48] sm:$0xff] %vm858, %v835
        %869 = vst.msk [vmem:[#allocation2 + $0x50] sm:$0xff] %vm858, %v836
        %870 = vst.msk [vmem:[#allocation2 + $0x58] sm:$0xff] %vm858, %v837
        %871 = vst.msk [vmem:[#allocation2 + $0x60] sm:$0xff] %vm858, %v838
        %872 = vst.msk [vmem:[#allocation2 + $0x68] sm:$0xff] %vm858, %v839
        %873 = vst.msk [vmem:[#allocation2 + $0x70] sm:$0xff] %vm858, %v840
        %874 = vst.msk [vmem:[#allocation2 + $0x78] sm:$0xff] %vm858, %v841
        %875 = vst.msk [vmem:[#allocation2 + $0x80] sm:$0xff] %vm858, %v842
        %876 = vst.msk [vmem:[#allocation2 + $0x88] sm:$0xff] %vm858, %v843
        %877 = vst.msk [vmem:[#allocation2 + $0x90] sm:$0xff] %vm858, %v844
        %878 = vst.msk [vmem:[#allocation2 + $0x98] sm:$0xff] %vm858, %v845
        %879 = vst.msk [vmem:[#allocation2 + $0xa0] sm:$0xff] %vm858, %v846
        %880 = vst.msk [vmem:[#allocation2 + $0xa8] sm:$0xff] %vm858, %v847
        %881 = vst.msk [vmem:[#allocation2 + $0xb0] sm:$0xff] %vm858, %v848
        %882 = vst.msk [vmem:[#allocation2 + $0xb8] sm:$0xff] %vm858, %v849
        %883 = vst.msk [vmem:[#allocation2 + $0xc0] sm:$0xff] %vm858, %v850
        %884 = vst.msk [vmem:[#allocation2 + $0xc8] sm:$0xff] %vm858, %v851
        %885 = vst.msk [vmem:[#allocation2 + $0xd0] sm:$0xff] %vm858, %v852
        %886 = vst.msk [vmem:[#allocation2 + $0xd8] sm:$0xff] %vm858, %v853
        %887 = vst.msk [vmem:[#allocation2 + $0xe0] sm:$0xff] %vm858, %v854
        %888 = vst.msk [vmem:[#allocation2 + $0xe8] sm:$0xff] %vm858, %v855
        %889 = vst.msk [vmem:[#allocation2 + $0xf0] sm:$0xff] %vm858, %v856
        %890 = vst.msk [vmem:[#allocation2 + $0xf8] sm:$0xff] %vm858, %v857
        // Predicated region
        $region37: #{conv_bn.1} parent=31 // pred_check
          %p891 = pneg %p259
        $region38: #{conv_bn.1} parent=31 // pred_check_branch
          %893 = sbr.rel (%p891) target = $region40
        $region39: #{conv_bn.1} parent=31 // pred_region
          %v894 = vld [vmem:[#allocation2] sm:$0xff]
          %v895 = vld [vmem:[#allocation2 + $0x8] sm:$0xff]
          %v896 = vld [vmem:[#allocation2 + $0x10] sm:$0xff]
          %v897 = vld [vmem:[#allocation2 + $0x18] sm:$0xff]
          %v898 = vld [vmem:[#allocation2 + $0x20] sm:$0xff]
          %v899 = vld [vmem:[#allocation2 + $0x28] sm:$0xff]
          %v900 = vld [vmem:[#allocation2 + $0x30] sm:$0xff]
          %v901 = vld [vmem:[#allocation2 + $0x38] sm:$0xff]
          %v902 = vld [vmem:[#allocation2 + $0x40] sm:$0xff]
          %v903 = vld [vmem:[#allocation2 + $0x48] sm:$0xff]
          %v904 = vld [vmem:[#allocation2 + $0x50] sm:$0xff]
          %v905 = vld [vmem:[#allocation2 + $0x58] sm:$0xff]
          %v906 = vld [vmem:[#allocation2 + $0x60] sm:$0xff]
          %v907 = vld [vmem:[#allocation2 + $0x68] sm:$0xff]
          %v908 = vld [vmem:[#allocation2 + $0x70] sm:$0xff]
          %v909 = vld [vmem:[#allocation2 + $0x78] sm:$0xff]
          %v910 = vld [vmem:[#allocation2 + $0x80] sm:$0xff]
          %v911 = vld [vmem:[#allocation2 + $0x88] sm:$0xff]
          %v912 = vld [vmem:[#allocation2 + $0x90] sm:$0xff]
          %v913 = vld [vmem:[#allocation2 + $0x98] sm:$0xff]
          %v914 = vld [vmem:[#allocation2 + $0xa0] sm:$0xff]
          %v915 = vld [vmem:[#allocation2 + $0xa8] sm:$0xff]
          %v916 = vld [vmem:[#allocation2 + $0xb0] sm:$0xff]
          %v917 = vld [vmem:[#allocation2 + $0xb8] sm:$0xff]
          %v918 = vld [vmem:[#allocation2 + $0xc0] sm:$0xff]
          %v919 = vld [vmem:[#allocation2 + $0xc8] sm:$0xff]
          %v920 = vld [vmem:[#allocation2 + $0xd0] sm:$0xff]
          %v921 = vld [vmem:[#allocation2 + $0xd8] sm:$0xff]
          %v922 = vld [vmem:[#allocation2 + $0xe0] sm:$0xff]
          %v923 = vld [vmem:[#allocation2 + $0xe8] sm:$0xff]
          %v924 = vld [vmem:[#allocation2 + $0xf0] sm:$0xff]
          %v925 = vld [vmem:[#allocation2 + $0xf8] sm:$0xff]
          %v926 = vld [vmem:[%s257] sm:$0x1]
          %v928 = vperm.slane %v926, 0
          %v930 = vadd.f32 %v894, %v928
          %v931 = vadd.f32 %v895, %v928
          %v932 = vadd.f32 %v896, %v928
          %v933 = vadd.f32 %v897, %v928
          %v934 = vadd.f32 %v898, %v928
          %v935 = vadd.f32 %v899, %v928
          %v936 = vadd.f32 %v900, %v928
          %v937 = vadd.f32 %v901, %v928
          %v938 = vadd.f32 %v902, %v928
          %v939 = vadd.f32 %v903, %v928
          %v940 = vadd.f32 %v904, %v928
          %v941 = vadd.f32 %v905, %v928
          %v942 = vadd.f32 %v906, %v928
          %v943 = vadd.f32 %v907, %v928
          %v944 = vadd.f32 %v908, %v928
          %v945 = vadd.f32 %v909, %v928
          %v946 = vadd.f32 %v910, %v928
          %v947 = vadd.f32 %v911, %v928
          %v948 = vadd.f32 %v912, %v928
          %v949 = vadd.f32 %v913, %v928
          %v950 = vadd.f32 %v914, %v928
          %v951 = vadd.f32 %v915, %v928
          %v952 = vadd.f32 %v916, %v928
          %v953 = vadd.f32 %v917, %v928
          %v954 = vadd.f32 %v918, %v928
          %v955 = vadd.f32 %v919, %v928
          %v956 = vadd.f32 %v920, %v928
          %v957 = vadd.f32 %v921, %v928
          %v958 = vadd.f32 %v922, %v928
          %v959 = vadd.f32 %v923, %v928
          %v960 = vadd.f32 %v924, %v928
          %v961 = vadd.f32 %v925, %v928
          %v962 = vmax.f32 %v930, 0.0
          %v963 = vmax.f32 %v931, 0.0
          %v964 = vmax.f32 %v932, 0.0
          %v965 = vmax.f32 %v933, 0.0
          %v966 = vmax.f32 %v934, 0.0
          %v967 = vmax.f32 %v935, 0.0
          %v968 = vmax.f32 %v936, 0.0
          %v969 = vmax.f32 %v937, 0.0
          %v970 = vmax.f32 %v938, 0.0
          %v971 = vmax.f32 %v939, 0.0
          %v972 = vmax.f32 %v940, 0.0
          %v973 = vmax.f32 %v941, 0.0
          %v974 = vmax.f32 %v942, 0.0
          %v975 = vmax.f32 %v943, 0.0
          %v976 = vmax.f32 %v944, 0.0
          %v977 = vmax.f32 %v945, 0.0
          %v978 = vmax.f32 %v946, 0.0
          %v979 = vmax.f32 %v947, 0.0
          %v980 = vmax.f32 %v948, 0.0
          %v981 = vmax.f32 %v949, 0.0
          %v982 = vmax.f32 %v950, 0.0
          %v983 = vmax.f32 %v951, 0.0
          %v984 = vmax.f32 %v952, 0.0
          %v985 = vmax.f32 %v953, 0.0
          %v986 = vmax.f32 %v954, 0.0
          %v987 = vmax.f32 %v955, 0.0
          %v988 = vmax.f32 %v956, 0.0
          %v989 = vmax.f32 %v957, 0.0
          %v990 = vmax.f32 %v958, 0.0
          %v991 = vmax.f32 %v959, 0.0
          %v992 = vmax.f32 %v960, 0.0
          %v993 = vmax.f32 %v961, 0.0
          %v994 = vpack.c.bf16 %v962, %v962
          %v995 = vpack.c.bf16 %v963, %v963
          %v996 = vpack.c.bf16 %v964, %v964
          %v997 = vpack.c.bf16 %v965, %v965
          %v998 = vpack.c.bf16 %v966, %v966
          %v999 = vpack.c.bf16 %v967, %v967
          %v1000 = vpack.c.bf16 %v968, %v968
          %v1001 = vpack.c.bf16 %v969, %v969
          %v1002 = vpack.c.bf16 %v970, %v970
          %v1003 = vpack.c.bf16 %v971, %v971
          %v1004 = vpack.c.bf16 %v972, %v972
          %v1005 = vpack.c.bf16 %v973, %v973
          %v1006 = vpack.c.bf16 %v974, %v974
          %v1007 = vpack.c.bf16 %v975, %v975
          %v1008 = vpack.c.bf16 %v976, %v976
          %v1009 = vpack.c.bf16 %v977, %v977
          %v1010 = vpack.c.bf16 %v978, %v978
          %v1011 = vpack.c.bf16 %v979, %v979
          %v1012 = vpack.c.bf16 %v980, %v980
          %v1013 = vpack.c.bf16 %v981, %v981
          %v1014 = vpack.c.bf16 %v982, %v982
          %v1015 = vpack.c.bf16 %v983, %v983
          %v1016 = vpack.c.bf16 %v984, %v984
          %v1017 = vpack.c.bf16 %v985, %v985
          %v1018 = vpack.c.bf16 %v986, %v986
          %v1019 = vpack.c.bf16 %v987, %v987
          %v1020 = vpack.c.bf16 %v988, %v988
          %v1021 = vpack.c.bf16 %v989, %v989
          %v1022 = vpack.c.bf16 %v990, %v990
          %v1023 = vpack.c.bf16 %v991, %v991
          %v1024 = vpack.c.bf16 %v992, %v992
          %v1025 = vpack.c.bf16 %v993, %v993
          %vm1026 = vcmask 519168
          %1027 = vst.msk [vmem:[%s233] sm:$0xf] %vm1026, %v994
          %1028 = vst.msk [vmem:[%s233 + $0x4] sm:$0xf] %vm1026, %v995
          %1029 = vst.msk [vmem:[%s233 + $0x8] sm:$0xf] %vm1026, %v996
          %1030 = vst.msk [vmem:[%s233 + $0xc] sm:$0xf] %vm1026, %v997
          %1031 = vst.msk [vmem:[%s233 + $0x10] sm:$0xf] %vm1026, %v998
          %1032 = vst.msk [vmem:[%s233 + $0x14] sm:$0xf] %vm1026, %v999
          %1033 = vst.msk [vmem:[%s233 + $0x18] sm:$0xf] %vm1026, %v1000
          %1034 = vst.msk [vmem:[%s233 + $0x1c] sm:$0xf] %vm1026, %v1001
          %1035 = vst.msk [vmem:[%s233 + $0x20] sm:$0xf] %vm1026, %v1002
          %1036 = vst.msk [vmem:[%s233 + $0x24] sm:$0xf] %vm1026, %v1003
          %1037 = vst.msk [vmem:[%s233 + $0x28] sm:$0xf] %vm1026, %v1004
          %1038 = vst.msk [vmem:[%s233 + $0x2c] sm:$0xf] %vm1026, %v1005
          %1039 = vst.msk [vmem:[%s233 + $0x30] sm:$0xf] %vm1026, %v1006
          %1040 = vst.msk [vmem:[%s233 + $0x34] sm:$0xf] %vm1026, %v1007
          %1041 = vst.msk [vmem:[%s233 + $0x38] sm:$0xf] %vm1026, %v1008
          %1042 = vst.msk [vmem:[%s233 + $0x3c] sm:$0xf] %vm1026, %v1009
          %1043 = vst.msk [vmem:[%s233 + $0x40] sm:$0xf] %vm1026, %v1010
          %1044 = vst.msk [vmem:[%s233 + $0x44] sm:$0xf] %vm1026, %v1011
          %1045 = vst.msk [vmem:[%s233 + $0x48] sm:$0xf] %vm1026, %v1012
          %1046 = vst.msk [vmem:[%s233 + $0x4c] sm:$0xf] %vm1026, %v1013
          %1047 = vst.msk [vmem:[%s233 + $0x50] sm:$0xf] %vm1026, %v1014
          %1048 = vst.msk [vmem:[%s233 + $0x54] sm:$0xf] %vm1026, %v1015
          %1049 = vst.msk [vmem:[%s233 + $0x58] sm:$0xf] %vm1026, %v1016
          %1050 = vst.msk [vmem:[%s233 + $0x5c] sm:$0xf] %vm1026, %v1017
          %1051 = vst.msk [vmem:[%s233 + $0x60] sm:$0xf] %vm1026, %v1018
          %1052 = vst.msk [vmem:[%s233 + $0x64] sm:$0xf] %vm1026, %v1019
          %1053 = vst.msk [vmem:[%s233 + $0x68] sm:$0xf] %vm1026, %v1020
          %1054 = vst.msk [vmem:[%s233 + $0x6c] sm:$0xf] %vm1026, %v1021
          %1055 = vst.msk [vmem:[%s233 + $0x70] sm:$0xf] %vm1026, %v1022
          %1056 = vst.msk [vmem:[%s233 + $0x74] sm:$0xf] %vm1026, %v1023
          %1057 = vst.msk [vmem:[%s233 + $0x78] sm:$0xf] %vm1026, %v1024
          %1058 = vst.msk [vmem:[%s233 + $0x7c] sm:$0xf] %vm1026, %v1025
        $region40: #{conv_bn.1} parent=31 // pred_fallthru
          _
        %s1059 = sand.u32 %s128, 1
        %s1060 = scalar_lea.sflag [#allocation4], %s1059
        %s1061 = sand.u32 %s128, 1
        %s1062 = smul.addr %s1061, 128
        %s1063 = scalar_lea.vmem [#allocation3], %s1062
        // Predicated region
        $region41: #{conv_bn.1} parent=31 // pred_check
          %p1064 = pneg %p138
        $region42: #{conv_bn.1} parent=31 // pred_check_branch
          %1066 = sbr.rel (%p1064) target = $region44
        $region43: #{conv_bn.1} parent=31 // pred_region
          %s1067 = smul.u32 32, %s22
          %1069 = vsyncadd %s1060, 0
          %s1070 = sadd.s32 %s23, %s1067
          %s1071 = smul.addr %s1070, 4
          %s1072 = scalar_lea.hbm %s3, %s1071
          %s1073 = sshll.u32 %s1063, 4
          %s1074 = int_to_ptr.vmem [resolvable:$true] %s1073
          %s1075 = sshll.u32 %s1072, 4
          %s1076 = int_to_ptr.hbm [resolvable:$true] %s1075
          %1081 = dma.vmem_to_hbm [thread:$0]  %s1074, 2048, %s1076, %s1060, 64, 64, 4
        $region44: #{conv_bn.1} parent=31 // pred_fallthru
          _
      $region32: #{conv_bn.1} parent=5 // pred_fallthru
        _
      %p1082 = scmp.le.s32.totalorder 2, %s12
      // Predicated region
      $region45: #{conv_bn.1} parent=5 // pred_check
        %p1083 = pneg %p1082
      $region46: #{conv_bn.1} parent=5 // pred_check_branch
        %1085 = sbr.rel (%p1083) target = $region48
      $region47: #{conv_bn.1} parent=5 // pred_region
        %s1086 = ssub.s32 %s12, 2
        // Predicated region
        $region49: #{conv_bn.1} parent=47 // pred_check
          %p1087 = pneg %p144
        $region50: #{conv_bn.1} parent=47 // pred_check_branch
          %1089 = sbr.rel (%p1087) target = $region52
        $region51: #{conv_bn.1} parent=47 // pred_region
          %s1090 = sand.u32 %s129, 1
          %s1091 = scalar_lea.sflag [#allocation4], %s1090
          %s1092 = sand.u32 %s129, 1
          %s1093 = smul.addr %s1092, 128
          %s1094 = scalar_lea.vmem [#allocation3], %s1093
          %1096 = dma.done %s1091, 2048
        $region52: #{conv_bn.1} parent=47 // pred_fallthru
          _
      $region48: #{conv_bn.1} parent=5 // pred_fallthru
        _
    $region6: #{conv_bn.1} parent=1 // loop_footer
      %s16 = sadd.s32 1, %s12
    $region7: #{conv_bn.1} parent=1 // loop_footer_branch
      %11 = sbr.rel target = $region3
    $region8: #{conv_bn.1} parent=1 // loop_exit
      _
    %1097 = vsyncpa [#allocation4], 1
    %s1098 = scalar_lea.sflag [#allocation4], 1
    %1099 = vsyncpa %s1098, 1

</llo_original>
